<compile_context>
chip_gen: v5e
topology: v5e:2x2
jax: 0.10.0
libtpu: 0.0.40
codegen_flags: <defaults>
</compile_context>

<pallas_src>
import functools

import jax
import jax.numpy as jnp
from jax.experimental import pallas as pl
from jax.experimental.pallas import tpu as pltpu


def _queue_kernel(ptr_ref, keys_ref, data_in_ref, out_data_ref, copy_sem,
                  *, batch, align):
    """Write the `batch`-row keys slab into the (aliased) queue at `ptr`.

    ptr_ref      : SMEM scalar-prefetch ref, shape (1,), int32
    keys_ref     : VMEM (batch, feature_dim)          (keys tile)
    data_in_ref  : HBM ref, aliased with out_data_ref  (never read)
    out_data_ref : HBM ref (queue_size, feature_dim)   (queue buffer, in place)
    copy_sem     : DMA semaphore
    """
    del data_in_ref  # aliased with out_data_ref; must not be read.

    ptr = ptr_ref[0]
    if align > 1:
        # ptr is always a multiple of `batch` (qsize % batch == 0, starts at 0),
        # so when batch is sublane-aligned the store offset is aligned too.
        ptr = pl.multiple_of(ptr, align)

    # One contiguous DMA: keys (VMEM) -> queue rows [ptr, ptr+batch) (HBM).
    cp = pltpu.make_async_copy(
        keys_ref, out_data_ref.at[pl.ds(ptr, batch), :], copy_sem)
    cp.start()
    cp.wait()


def queue_forward(data, ptr, keys):
    """Functional Queue.forward: returns (new_data, new_ptr)."""
    qsize, feature_dim = data.shape
    batch = keys.shape[0]
    assert qsize % batch == 0, "queue_size must be divisible by batch_size"
    assert keys.shape[1] == feature_dim
    assert keys.dtype == data.dtype

    # Only hint sublane alignment (8 rows for f32) when it actually holds.
    align = 8 if batch % 8 == 0 else 0
    kernel = functools.partial(_queue_kernel, batch=batch, align=align)

    ptr = ptr.astype(jnp.int32)

    new_data = pl.pallas_call(
        kernel,
        out_shape=jax.ShapeDtypeStruct((qsize, feature_dim), data.dtype),
        grid_spec=pltpu.PrefetchScalarGridSpec(
            num_scalar_prefetch=1,          # ptr lands in SMEM
            grid=(1,),
            in_specs=[
                # keys: small tile, auto-staged into VMEM.
                pl.BlockSpec((batch, feature_dim), lambda i, p: (0, 0)),
                # queue: stays in HBM, no auto-DMA, aliased with the output.
                pl.BlockSpec(memory_space=pl.ANY),
            ],
            out_specs=pl.BlockSpec(memory_space=pl.ANY),
            scratch_shapes=[pltpu.SemaphoreType.DMA(())],
        ),
        # Inputs are (ptr, keys, data) -> data is input index 2; output 0 = new_data.
        input_output_aliases={2: 0},
        compiler_params=pltpu.CompilerParams(
            dimension_semantics=("arbitrary",)),
    )(ptr, keys, data)

    # Pointer arithmetic hoisted out of the kernel (scalar, essentially free).
    new_ptr = ((ptr + batch) % qsize).astype(jnp.int32)
    return new_data, new_ptr


if __name__ == "__main__":
    # Small but lane-dense shapes (feature_dim multiple of 128, batch multiple of 8).
    queue_size = 64
    feature_dim = 128
    batch = 8

    rng = jax.random.PRNGKey(0)
    k0, k1 = jax.random.split(rng)
    keys0 = jax.random.normal(k0, (batch, feature_dim), dtype=jnp.float32)
    keys1 = jax.random.normal(k1, (batch, feature_dim), dtype=jnp.float32)

    # Buffers as registered in __init__ (torch.long -> int32 on TPU).
    data = jnp.zeros((queue_size, feature_dim), dtype=jnp.float32)
    ptr = jnp.zeros((1,), dtype=jnp.int32)

    # Reference semantics (plain JAX), computed up-front so it never touches
    # a buffer that may have been donated to the kernel.
    ref_data1 = jnp.zeros((queue_size, feature_dim), jnp.float32).at[0:batch, :].set(keys0)
    ref_data2 = ref_data1.at[batch:2 * batch, :].set(keys1)

    # First forward pass: enqueue keys0 at ptr=0.
    new_data1, new_ptr1 = queue_forward(data, ptr, keys0)
    jax.block_until_ready((new_data1, new_ptr1))
    assert jnp.allclose(new_data1, ref_data1)
    assert int(new_ptr1[0]) == batch % queue_size

    # Second pass exercises the data-dependent pointer offset.
    new_data2, new_ptr2 = queue_forward(new_data1, new_ptr1, keys1)
    jax.block_until_ready((new_data2, new_ptr2))
    assert jnp.allclose(new_data2, ref_data2)
    assert int(new_ptr2[0]) == (2 * batch) % queue_size

    # TODO(synk): concat_all_gather (multi-host all_gather) not implemented;
    # world_size == 1 path only, matching the single-process PyTorch behavior.
    print("KERNEL_OK")
</pallas_src>

<mosaic_0001>
module attributes {stable_mosaic.version = 11 : i64} {
  func.func @_queue_kernel(%arg0: i32, %arg1: memref<1xi32, #tpu.memory_space<smem>>, %arg2: memref<8x128xf32, #tpu.memory_space<vmem>>, %arg3: memref<64x128xf32, #tpu.memory_space<any>>, %arg4: memref<64x128xf32, #tpu.memory_space<any>>, %arg5: memref<!tpu.dma_semaphore, #tpu.memory_space<semaphore_mem>>) attributes {dimension_semantics = [#tpu.dimension_semantics<arbitrary>], iteration_bounds = array<i64: 1>, scalar_prefetch = 1 : i64, scratch_operands = 1 : i64, tpu.core_type = #tpu.core_type<tc>, window_params = [{pipeline_mode = #tpu.pipeline_mode<synchronous>, transform_indices = @transform_0, window_bounds = array<i64: 8, 128>}, {}, {}]} {
    %c0 = arith.constant 0 : index
    %0 = memref.load %arg1[%c0] : memref<1xi32, #tpu.memory_space<smem>>
    %1 = tpu.assume_multiple %0, 8 : i32
    %c0_i32 = arith.constant 0 : i32
    %2 = tpu.memref_slice %arg4[%1, %c0_i32] : memref<64x128xf32, #tpu.memory_space<any>> -> memref<8x128xf32, #tpu.memory_space<any>>
    tpu.enqueue_dma source(%arg2 : memref<8x128xf32, #tpu.memory_space<vmem>>) target(%2 : memref<8x128xf32, #tpu.memory_space<any>>) target_semaphore(%arg5 : memref<!tpu.dma_semaphore, #tpu.memory_space<semaphore_mem>>)
    %c0_i32_0 = arith.constant 0 : i32
    %3 = tpu.memref_slice %arg4[%1, %c0_i32_0] : memref<64x128xf32, #tpu.memory_space<any>> -> memref<8x128xf32, #tpu.memory_space<any>>
    tpu.wait_dma2 semaphore(%arg5 : memref<!tpu.dma_semaphore, #tpu.memory_space<semaphore_mem>>) src(%arg2 : memref<8x128xf32, #tpu.memory_space<vmem>>) dst(%3 : memref<8x128xf32, #tpu.memory_space<any>>)
    return
  }
  func.func @transform_0(%arg0: i32, %arg1: memref<1xi32, #tpu.memory_space<smem>>) -> (i32, i32) {
    %c0_i32 = arith.constant 0 : i32
    %c0_i32_0 = arith.constant 0 : i32
    %c0_i32_1 = arith.constant 0 : i32
    return %c0_i32, %c0_i32_0 : i32, i32
  }
}

</mosaic_0001>

<llo_original>
// kernel: tpu_custom_call.1
$region0: #{tpu_custom_call.1}
  #allocation0 [shape = 'u32[]', space=smem, size = 0x4, offset = 0x4, fixed_abs, tag = 'smem constant byte address 0x4 - core index']
  #allocation1 [shape = 'u32[72,128]{1,0:T(1,128)}', space=vmem, size = 0x9000, scoped, tag = 'internal scratch']
  #allocation2 [shape = 's32[1]{0}', space=sflag, size = 0x4, scoped, tag = 'scratch operand']
  #allocation3 [shape = 's32[1]{0}', space=sflag, size = 0x4, scoped, tag = 'scoped memory for tpu_custom_call.1']
  #allocation4 [shape = 's32[1]{0:T(128)S(6)}', space=smem, size = 0x200, scoped, tag = 'prefetched SMEM operand 0']
  #allocation5 [shape = 's32[]', space=sflag, size = 0x4, offset = 0, fixed_abs, tag = 'sflag constant byte address 0x0 - dummy sync flag']
  #allocation6 [shape = 's32[]', space=sflag, size = 0x4, offset = 0, fixed_abs, tag = 'sflag constant byte address 0x0 - dummy sync flag']
  #allocation7 [shape = 'u32[]', space=smem, size = 0x4, offset = 0x44, fixed_abs, tag = 'smem constant byte address 0x44 - assertion arg 0']
  #allocation8 [shape = 'u32[]', space=smem, size = 0x4, offset = 0x48, fixed_abs, tag = 'smem constant byte address 0x48 - assertion arg 1']
  %s0 = inlined_call_operand.<no memory space> [shape: s32[1], index: 0, kind: input, shape index: {}]
  %s1 = inlined_call_operand.vmem [shape: f32[8,128], index: 1, kind: input, shape index: {}]
  %s2 = inlined_call_operand.hbm [shape: f32[64,128], index: 2, kind: input, shape index: {}, may-alias: {2,3}]
  %s3 = inlined_call_operand.hbm [shape: f32[64,128], index: 3, kind: output, shape index: {}, may-alias: {2,3}]
  %s4 = sld [smem:[#allocation0]]
  $region10: #{tpu_custom_call.1} parent=0
    _
  %s6 = ssub.s32 1, %s4
  %s7 = scalar_select 0, %s6, %s4
  %8 = sst [smem:[#allocation4]] %s0
  // Predicated region
  $region2: #{tpu_custom_call.1} parent=0 // pred_check
    _
  $region3: #{tpu_custom_call.1} parent=0 // pred_check_branch
    %10 = sbr.rel (0) target = $region5
  $region4: #{tpu_custom_call.1} parent=0 // pred_region
    _
  $region5: #{tpu_custom_call.1} parent=0 // pred_fallthru
    _
  %s11 = sld [smem:[#allocation4]]
  %s12 = scalar_lea.hbm %s3, %s11
  // Predicated region
  $region6: #{tpu_custom_call.1} parent=0 // pred_check
    _
  $region7: #{tpu_custom_call.1} parent=0 // pred_check_branch
    %14 = sbr.rel target = $region9
  $region8: #{tpu_custom_call.1} parent=0 // pred_region
    %15 = sst [smem:[#allocation7]] [#allocation6]
    %16 = sst [smem:[#allocation8]] [#allocation5]
  $region9: #{tpu_custom_call.1} parent=0 // pred_fallthru
    _
  %18 = shalt.err (0)
  %s20 = sshll.u32 %s1, 4
  %s21 = int_to_ptr.vmem [resolvable:$true] %s20
  %s22 = sshll.u32 %s12, 4
  %s23 = int_to_ptr.hbm [resolvable:$true] %s22
  %25 = dma.vmem_to_hbm [thread:$0]  %s21, 128, %s23, [#allocation2]
  %s26 = smul.u32 8, 1
  %s27 = sshll.u32 %s26, 4
  %28 = dma.done [#allocation2], %s27
  %29 = vsyncmov [#allocation2]
  %s30 = vpop.sfrf %29
  %p31 = scmp.eq.s32.totalorder %s30, 0
  %p32 = pneg %p31
  %34 = shalt.err (%p32)

</llo_original>
